<compile_context>
chip_gen: v7x
topology: tpu7x:2x2x1
jax: 0.10.0
libtpu: 0.0.40
codegen_flags: <defaults>
</compile_context>

<pallas_src>
import functools

import jax
import jax.numpy as jnp
from jax.experimental import pallas as pl
from jax.experimental.pallas import tpu as pltpu


def make_divisible(v, divisor=8, min_value=None, round_limit=0.9):
    min_value = min_value or divisor
    new_v = max(min_value, int(v + divisor / 2) // divisor * divisor)
    if new_v < round_limit * v:
        new_v += divisor
    return new_v


def _round_up(v, m):
    return ((v + m - 1) // m) * m


def _pick_div_tile(n, target):
    """Largest multiple-of-8 divisor of n that is <= target; else n (full dim).

    Block shapes must be a multiple of 8 on the sublane axis OR the full dim,
    and must divide n exactly so the KV softmax never reads a ragged tile."""
    if n <= target:
        return n
    t = (min(target, n) // 8) * 8
    for cand in range(t, 7, -8):
        if n % cand == 0:
            return cand
    return n  # fallback: single full tile (only hit for awkward odd HW)


def _row_tile(n_rows, bytes_per_row, budget_bytes):
    target = max(8, budget_bytes // max(bytes_per_row, 1))
    return _pick_div_tile(n_rows, target)


# ---------------------------------------------------------------------------
# Kernel P: fused t/p/g projection (row-tiled), bf16 output.
#   tpg = cast_bf16( x_f32.bf16 @ [scale*Wt | Wp | Wg] + [scale*bt | bp | bg] )
# ---------------------------------------------------------------------------
def _proj_kernel(x_ref, wcat_ref, bcat_ref, tpg_ref):
    x = x_ref[...].astype(jnp.bfloat16)                               # (tile, C_pad)
    tpg = (jnp.dot(x, wcat_ref[...], preferred_element_type=jnp.float32)
           + bcat_ref[...])                                           # (tile, 3*RD) f32
    tpg_ref[...] = tpg.astype(jnp.bfloat16)


# ---------------------------------------------------------------------------
# Kernel A: flash-style non-local attention (q-tiled, kv-tiled) + z projection
#           + per-(b, q-tile) BN partial statistics.
# ---------------------------------------------------------------------------
def _attn_kernel(t_ref, p_ref, g_ref, wz_ref, bz_ref,                 # inputs
                 z_ref, sum_ref, sumsq_ref,                           # outputs
                 m_ref, l_ref, acc_ref):                              # scratch
    kv = pl.program_id(2)

    @pl.when(kv == 0)
    def _():
        m_ref[...] = jnp.full_like(m_ref, -jnp.inf)
        l_ref[...] = jnp.zeros_like(l_ref)
        acc_ref[...] = jnp.zeros_like(acc_ref)

    t = t_ref[0]                                                      # (tq,  RD) bf16 (scale folded in)
    p = p_ref[0]                                                      # (tkv, RD) bf16
    g = g_ref[0]                                                      # (tkv, RD) bf16

    s = jax.lax.dot_general(t, p, (((1,), (1,)), ((), ())),
                            preferred_element_type=jnp.float32)       # (tq, tkv) f32
    m_new = jnp.maximum(m_ref[...], jnp.max(s, axis=-1, keepdims=True))
    alpha = jnp.exp(m_ref[...] - m_new)
    p_exp = jnp.exp(s - m_new)                                        # f32 exp (accuracy > bf16-EUP here)
    l_ref[...] = alpha * l_ref[...] + jnp.sum(p_exp, axis=-1, keepdims=True)
    acc_ref[...] = alpha * acc_ref[...] + jnp.dot(
        p_exp.astype(jnp.bfloat16), g, preferred_element_type=jnp.float32)
    m_ref[...] = m_new

    @pl.when(kv == pl.num_programs(2) - 1)
    def _():
        y = acc_ref[...] * pl.reciprocal(l_ref[...], approx=True)     # (tq, RD) f32
        z = jnp.dot(y.astype(jnp.bfloat16), wz_ref[...],
                    preferred_element_type=jnp.float32) + bz_ref[...]  # (tq, C_pad) f32
        z_ref[0] = z.astype(jnp.bfloat16)                             # bf16 writeback
        sum_ref[0] = jnp.sum(z, axis=0, keepdims=True)                # f32 BN partials
        sumsq_ref[0] = jnp.sum(z * z, axis=0, keepdims=True)


# ---------------------------------------------------------------------------
# Kernel B: row-tiled BatchNorm normalize + residual add.
#   out = z * bn_scale + bn_shift + shortcut      (bn_scale/shift precomputed)
# ---------------------------------------------------------------------------
def _bn_residual_kernel(z_ref, sc_ref, scale_ref, shift_ref, out_ref):
    out_ref[...] = (z_ref[...].astype(jnp.float32) * scale_ref[...]
                    + shift_ref[...] + sc_ref[...])


def non_local_attn(x_nchw, params, *, use_scale=True, eps=1e-5):
    """Forward pass of NonLocalAttn. x_nchw: (B, C, H, W) float32."""
    B, C, H, W = x_nchw.shape
    HW = H * W
    rd = params["wt"].shape[1]
    scale = float(C) ** (-0.5) if use_scale else 1.0

    c_pad = _round_up(C, 128)
    rd_pad = _round_up(rd, 128)
    n_rows = B * HW

    # Single padded channels-last f32 copy of x: used as the matmul input (cast
    # to bf16 in-kernel) AND as the residual shortcut.  Zero channel padding is
    # exact: padded weight rows/cols, biases and BN params are zero.
    x_pad = jnp.pad(jnp.transpose(x_nchw, (0, 2, 3, 1)).astype(jnp.float32),
                    ((0, 0), (0, 0), (0, 0), (0, c_pad - C))).reshape(n_rows, c_pad)

    # Fused projection weight [scale*Wt | Wp | Wg] : (C_pad, 3*RD_pad), bf16.
    w_cat = jnp.zeros((c_pad, 3 * rd_pad), jnp.float32)
    w_cat = w_cat.at[:C, 0:rd].set(params["wt"] * scale)
    w_cat = w_cat.at[:C, rd_pad:rd_pad + rd].set(params["wp"])
    w_cat = w_cat.at[:C, 2 * rd_pad:2 * rd_pad + rd].set(params["wg"])
    w_cat = w_cat.astype(jnp.bfloat16)
    b_cat = jnp.zeros((1, 3 * rd_pad), jnp.float32)
    b_cat = b_cat.at[:, 0:rd].set(params["bt"] * scale)
    b_cat = b_cat.at[:, rd_pad:rd_pad + rd].set(params["bp"])
    b_cat = b_cat.at[:, 2 * rd_pad:2 * rd_pad + rd].set(params["bg"])
    wz_pad = (jnp.zeros((rd_pad, c_pad), jnp.float32)
              .at[:rd, :C].set(params["wz"]).astype(jnp.bfloat16))
    bz_pad = jnp.zeros((1, c_pad), jnp.float32).at[:, :C].set(params["bz"])

    # ---------------- Kernel P: t/p/g projection -----------------------------
    proj_bytes_per_row = 2 * (4 * c_pad + 2 * 3 * rd_pad)   # dbl-buffered x(f32)+tpg(bf16)
    proj_tile = _row_tile(n_rows, proj_bytes_per_row, 8 << 20)
    tpg = pl.pallas_call(
        _proj_kernel,
        out_shape=jax.ShapeDtypeStruct((n_rows, 3 * rd_pad), jnp.bfloat16),
        grid_spec=pltpu.PrefetchScalarGridSpec(
            num_scalar_prefetch=0,
            grid=(n_rows // proj_tile,),
            in_specs=[
                pl.BlockSpec((proj_tile, c_pad), lambda i: (i, 0)),      # x (f32)
                pl.BlockSpec((c_pad, 3 * rd_pad), lambda i: (0, 0)),     # W_cat
                pl.BlockSpec((1, 3 * rd_pad), lambda i: (0, 0)),         # b_cat
            ],
            out_specs=pl.BlockSpec((proj_tile, 3 * rd_pad), lambda i: (i, 0)),
        ),
        compiler_params=pltpu.CompilerParams(dimension_semantics=("parallel",)),
    )(x_pad, w_cat, b_cat)
    tpg = tpg.reshape(B, HW, 3 * rd_pad)

    # ---------------- Kernel A: flash attention + z projection --------------
    tq = _pick_div_tile(HW, 256)     # bounds (tq, tkv) f32 temporaries
    tkv = _pick_div_tile(HW, 512)    # keeps K>=256 feeding the MXU when possible
    num_q = HW // tq
    num_kv = HW // tkv

    z, sums, sumsqs = pl.pallas_call(
        _attn_kernel,
        out_shape=(
            jax.ShapeDtypeStruct((B, HW, c_pad), jnp.bfloat16),    # z (bf16 writeback)
            jax.ShapeDtypeStruct((B, num_q, c_pad), jnp.float32),  # per-(b,q) channel sum
            jax.ShapeDtypeStruct((B, num_q, c_pad), jnp.float32),  # per-(b,q) channel sumsq
        ),
        grid_spec=pltpu.PrefetchScalarGridSpec(
            num_scalar_prefetch=0,
            grid=(B, num_q, num_kv),
            in_specs=[
                pl.BlockSpec((1, tq, rd_pad), lambda b, q, k: (b, q, 0)),    # t tile
                pl.BlockSpec((1, tkv, rd_pad), lambda b, q, k: (b, k, 1)),   # p tile
                pl.BlockSpec((1, tkv, rd_pad), lambda b, q, k: (b, k, 2)),   # g tile
                pl.BlockSpec((rd_pad, c_pad), lambda b, q, k: (0, 0)),       # Wz
                pl.BlockSpec((1, c_pad), lambda b, q, k: (0, 0)),            # bz
            ],
            out_specs=[
                pl.BlockSpec((1, tq, c_pad), lambda b, q, k: (b, q, 0)),
                pl.BlockSpec((1, 1, c_pad), lambda b, q, k: (b, q, 0)),
                pl.BlockSpec((1, 1, c_pad), lambda b, q, k: (b, q, 0)),
            ],
            scratch_shapes=[
                pltpu.VMEM((tq, 1), jnp.float32),        # running max  m
                pltpu.VMEM((tq, 1), jnp.float32),        # running sum  l
                pltpu.VMEM((tq, rd_pad), jnp.float32),   # output accumulator
            ],
        ),
        compiler_params=pltpu.CompilerParams(
            dimension_semantics=("parallel", "parallel", "arbitrary")),
    )(tpg, tpg, tpg, wz_pad, bz_pad)

    # ---------------- BatchNorm statistics (tiny jnp glue) -------------------
    # Training-mode batch stats, biased variance.  E[z^2]-E[z]^2 is clamped at 0.
    n = float(B * HW)
    mean = (jnp.sum(sums, axis=(0, 1)) / n).reshape(1, c_pad)
    var = jnp.maximum(jnp.sum(sumsqs, axis=(0, 1)).reshape(1, c_pad) / n
                      - mean * mean, 0.0)
    gamma = jnp.zeros((1, c_pad), jnp.float32).at[:, :C].set(params["gamma"])
    beta = jnp.zeros((1, c_pad), jnp.float32).at[:, :C].set(params["beta"])
    bn_scale = gamma * jax.lax.rsqrt(var + eps)
    bn_shift = beta - mean * bn_scale

    # ---------------- Kernel B: BN normalize + residual ----------------------
    bn_bytes_per_row = 2 * (2 + 4 + 4) * c_pad   # dbl-buffered z(bf16)+shortcut+out (f32)
    row_tile = _row_tile(n_rows, bn_bytes_per_row, 10 << 20)   # fits v5e's 16 MiB default
    out = pl.pallas_call(
        _bn_residual_kernel,
        out_shape=jax.ShapeDtypeStruct((n_rows, c_pad), jnp.float32),
        grid_spec=pltpu.PrefetchScalarGridSpec(
            num_scalar_prefetch=0,
            grid=(n_rows // row_tile,),
            in_specs=[
                pl.BlockSpec((row_tile, c_pad), lambda i: (i, 0)),   # z (bf16)
                pl.BlockSpec((row_tile, c_pad), lambda i: (i, 0)),   # shortcut (f32)
                pl.BlockSpec((1, c_pad), lambda i: (0, 0)),          # bn_scale
                pl.BlockSpec((1, c_pad), lambda i: (0, 0)),          # bn_shift
            ],
            out_specs=pl.BlockSpec((row_tile, c_pad), lambda i: (i, 0)),
        ),
        compiler_params=pltpu.CompilerParams(dimension_semantics=("parallel",)),
    )(z.reshape(n_rows, c_pad), x_pad, bn_scale, bn_shift)

    # strip channel padding, back to NCHW (kept for parity with the torch module)
    return out[:, :C].reshape(B, H, W, C).transpose(0, 3, 1, 2)


# ---------------------------------------------------------------------------
# Pure-jnp reference (torch-style structure, mirroring the kernel's bf16 MXU
# casts) used for a numerical sanity check of the Pallas plumbing.
# ---------------------------------------------------------------------------
def non_local_attn_reference(x_nchw, params, *, use_scale=True, eps=1e-5):
    B, C, H, W = x_nchw.shape
    HW = H * W
    scale = float(C) ** (-0.5) if use_scale else 1.0

    def mm(a, w):
        return jnp.einsum("bmk,kn->bmn", a.astype(jnp.bfloat16),
                          w.astype(jnp.bfloat16),
                          preferred_element_type=jnp.float32)

    x = jnp.transpose(x_nchw, (0, 2, 3, 1)).reshape(B, HW, C).astype(jnp.float32)
    t = mm(x, params["wt"] * scale) + params["bt"] * scale
    p = mm(x, params["wp"]) + params["bp"]
    g = mm(x, params["wg"]) + params["bg"]
    att = jnp.einsum("bmk,bnk->bmn", t.astype(jnp.bfloat16),
                     p.astype(jnp.bfloat16),
                     preferred_element_type=jnp.float32)            # (B, HW, HW)
    att = jnp.exp(att - jnp.max(att, axis=-1, keepdims=True))
    y = jnp.einsum("bmn,bnk->bmk", att.astype(jnp.bfloat16),
                   g.astype(jnp.bfloat16),
                   preferred_element_type=jnp.float32)
    y = y / jnp.sum(att, axis=-1, keepdims=True)
    z = mm(y, params["wz"]) + params["bz"]                           # (B, HW, C)

    zf = z.reshape(B * HW, C)
    mean = jnp.mean(zf, axis=0, keepdims=True)
    var = jnp.maximum(jnp.mean(zf * zf, axis=0, keepdims=True) - mean * mean, 0.0)
    out = (zf - mean) * jax.lax.rsqrt(var + eps) * params["gamma"] + params["beta"]
    out = out + x.reshape(B * HW, C)
    return out.reshape(B, H, W, C).transpose(0, 3, 1, 2)


def init_params(key, in_channels, rd_channels):
    """Deterministic init. Conv weights ~ kaiming normal (fan_out, relu), conv
    biases zero (matches timm reset_parameters). Note: timm zeroes the
    BatchNorm affine params (which would trivialize the block's output to the
    shortcut), so gamma/beta get non-zero deterministic values here to
    exercise the full compute path."""
    ks = jax.random.split(key, 6)
    std_down = (2.0 / rd_channels) ** 0.5       # fan_out = rd_channels * 1 * 1
    std_up = (2.0 / in_channels) ** 0.5         # fan_out = in_channels * 1 * 1
    # Weights stored already transposed for channels-last matmul: (C_in, C_out)
    wt = jax.random.normal(ks[0], (in_channels, rd_channels), jnp.float32) * std_down
    wp = jax.random.normal(ks[1], (in_channels, rd_channels), jnp.float32) * std_down
    wg = jax.random.normal(ks[2], (in_channels, rd_channels), jnp.float32) * std_down
    wz = jax.random.normal(ks[3], (rd_channels, in_channels), jnp.float32) * std_up
    bt = jnp.zeros((1, rd_channels), jnp.float32)
    bp = jnp.zeros((1, rd_channels), jnp.float32)
    bg = jnp.zeros((1, rd_channels), jnp.float32)
    bz = jnp.zeros((1, in_channels), jnp.float32)
    gamma = 1.0 + 0.1 * jax.random.normal(ks[4], (1, in_channels), jnp.float32)
    beta = 0.1 * jax.random.normal(ks[5], (1, in_channels), jnp.float32)
    return dict(wt=wt, bt=bt, wp=wp, bp=bp, wg=wg, bg=bg, wz=wz, bz=bz,
                gamma=gamma, beta=beta)


if __name__ == "__main__":
    B, C, H, W = 2, 32, 8, 8
    rd = make_divisible(C * (1 / 8), divisor=8)   # -> 8

    key = jax.random.PRNGKey(0)
    k_x, k_p = jax.random.split(key)
    x = jax.random.normal(k_x, (B, C, H, W), jnp.float32)
    params = init_params(k_p, C, rd)

    out = jax.block_until_ready(non_local_attn(x, params, use_scale=True))
    assert out.shape == (B, C, H, W)
    assert bool(jnp.all(jnp.isfinite(out)))

    ref = jax.block_until_ready(non_local_attn_reference(x, params, use_scale=True))
    max_err = float(jnp.max(jnp.abs(out - ref)))
    assert max_err < 5e-2, f"max abs error vs reference: {max_err}"
    print("KERNEL_OK")
</pallas_src>

<mosaic_0001>
module attributes {stable_mosaic.version = 11 : i64} {
  func.func @_proj_kernel(%arg0: i32, %arg1: memref<128x128xf32, #tpu.memory_space<vmem>>, %arg2: memref<128x384xbf16, #tpu.memory_space<vmem>>, %arg3: memref<1x384xf32, #tpu.memory_space<vmem>>, %arg4: memref<128x384xbf16, #tpu.memory_space<vmem>>) attributes {dimension_semantics = [#tpu.dimension_semantics<parallel>], iteration_bounds = array<i64: 1>, scalar_prefetch = 0 : i64, scratch_operands = 0 : i64, tpu.core_type = #tpu.core_type<tc>, window_params = [{transform_indices = @transform_0, window_bounds = array<i64: 128, 128>}, {pipeline_mode = #tpu.pipeline_mode<synchronous>, transform_indices = @transform_1, window_bounds = array<i64: 128, 384>}, {pipeline_mode = #tpu.pipeline_mode<synchronous>, transform_indices = @transform_2, window_bounds = array<i64: 1, 384>}, {transform_indices = @transform_3, window_bounds = array<i64: 128, 384>}]} {
    %c0 = arith.constant 0 : index
    %c0_0 = arith.constant 0 : index
    %0 = vector.load %arg1[%c0, %c0_0] : memref<128x128xf32, #tpu.memory_space<vmem>>, vector<128x128xf32>
    %1 = arith.truncf %0 : vector<128x128xf32> to vector<128x128xbf16>
    %c0_1 = arith.constant 0 : index
    %c0_2 = arith.constant 0 : index
    %2 = vector.load %arg2[%c0_1, %c0_2] : memref<128x384xbf16, #tpu.memory_space<vmem>>, vector<128x384xbf16>
    %cst = arith.constant dense<0.000000e+00> : vector<128x384xf32>
    %3 = tpu.matmul %1, %2, %cst {dimension_numbers = #tpu.dot_dimension_numbers<[1], [0], [0], [1], [0, 0, 1, 1], [], []>} : vector<128x128xbf16>, vector<128x384xbf16>, vector<128x384xf32> -> vector<128x384xf32>
    %c0_3 = arith.constant 0 : index
    %c0_4 = arith.constant 0 : index
    %4 = vector.load %arg3[%c0_3, %c0_4] : memref<1x384xf32, #tpu.memory_space<vmem>>, vector<1x384xf32>
    %5 = vector.broadcast %4 : vector<1x384xf32> to vector<128x384xf32>
    %6 = arith.addf %3, %5 : vector<128x384xf32>
    %7 = arith.truncf %6 : vector<128x384xf32> to vector<128x384xbf16>
    %c0_5 = arith.constant 0 : index
    %c0_6 = arith.constant 0 : index
    %8 = vector.load %arg4[%c0_5, %c0_6] : memref<128x384xbf16, #tpu.memory_space<vmem>>, vector<128x384xbf16>
    tpu.vector_store %arg4[%c0_5, %c0_6], %7 {strides = array<i32>} : memref<128x384xbf16, #tpu.memory_space<vmem>>, vector<128x384xbf16>,
    return
  }
  func.func @transform_0(%arg0: i32) -> (i32, i32) {
    %c0_i32 = arith.constant 0 : i32
    %c0_i32_0 = arith.constant 0 : i32
    return %arg0, %c0_i32 : i32, i32
  }
  func.func @transform_1(%arg0: i32) -> (i32, i32) {
    %c0_i32 = arith.constant 0 : i32
    %c0_i32_0 = arith.constant 0 : i32
    %c0_i32_1 = arith.constant 0 : i32
    return %c0_i32, %c0_i32_0 : i32, i32
  }
  func.func @transform_2(%arg0: i32) -> (i32, i32) {
    %c0_i32 = arith.constant 0 : i32
    %c0_i32_0 = arith.constant 0 : i32
    %c0_i32_1 = arith.constant 0 : i32
    return %c0_i32, %c0_i32_0 : i32, i32
  }
  func.func @transform_3(%arg0: i32) -> (i32, i32) {
    %c0_i32 = arith.constant 0 : i32
    %c0_i32_0 = arith.constant 0 : i32
    return %arg0, %c0_i32 : i32, i32
  }
}

</mosaic_0001>

<llo_original>
// kernel: tpu_custom_call.1
$region0: #{tpu_custom_call.1}
  #allocation0 [shape = 'u32[]', space=smem, size = 0x4, offset = 0x4, fixed_abs, tag = 'smem constant byte address 0x4 - core index']
  #allocation1 [shape = 'u32[144,128]{1,0:T(1,128)}', space=vmem, size = 0x12000, scoped, tag = 'internal scratch']
  %s0 = inlined_call_operand.hbm [shape: f32[128,128], index: 0, kind: input, shape index: {}]
  %s1 = inlined_call_operand.hbm [shape: bf16[128,384], index: 1, kind: input, shape index: {}]
  %s2 = inlined_call_operand.vmem [shape: f32[1,384], index: 2, kind: input, shape index: {}]
  %s3 = inlined_call_operand.hbm [shape: bf16[128,384], index: 3, kind: output, shape index: {}]
  %s4 = sld [smem:[#allocation0]]
  $region30: #{tpu_custom_call.1} parent=0
    _
  %s6 = ssub.s32 1, %s4
  %s7 = scalar_select 0, %s6, %s4
  $region1: #{tpu_custom_call.1} parent=0
    #allocation2 [shape = 'u8[65536]{0}', space=vmem, size = 0x10000, scoped, tag = 'input window, operand 0, single buffered']
    #allocation3 [shape = 's32[1]{0}', space=sflag, size = 0x4, scoped, tag = 'scoped memory for tpu_custom_call.1']
    #allocation4 [shape = 's32[1]{0}', space=sflag, size = 0x4, scoped, tag = 'scoped memory for tpu_custom_call.1']
    #allocation5 [shape = 'u8[98304]{0}', space=vmem, size = 0x18000, scoped, tag = 'input window, operand 1, single buffered']
    #allocation6 [shape = 's32[1]{0}', space=sflag, size = 0x4, scoped, tag = 'scoped memory for tpu_custom_call.1']
    #allocation7 [shape = 'u8[98304]{0}', space=vmem, size = 0x18000, scoped, tag = 'output window, operand 0, single buffered']
    %8 = vsyncpa [#allocation3], 0
    %9 = vsyncpa [#allocation6], 0
    %10 = vsyncpa [#allocation4], 0
    // Predicated region
    $region2: #{tpu_custom_call.1} parent=1 // pred_check
      _
    $region3: #{tpu_custom_call.1} parent=1 // pred_check_branch
      %12 = sbr.rel (0) target = $region5
    $region4: #{tpu_custom_call.1} parent=1 // pred_region
      %s14 = ssub.s32 2048, 2048
      %15 = vsyncadd [#allocation3], %s14
      %s16 = sshll.u32 [#allocation2], 4
      %s17 = int_to_ptr.vmem [resolvable:$true] %s16
      %22 = dma.hbm_to_vmem [thread:$0]  %s0, 2048, %s17, [#allocation3], 128, 128, 8
    $region5: #{tpu_custom_call.1} parent=1 // pred_fallthru
      _
    // Predicated region
    $region6: #{tpu_custom_call.1} parent=1 // pred_check
      _
    $region7: #{tpu_custom_call.1} parent=1 // pred_check_branch
      %24 = sbr.rel (0) target = $region9
    $region8: #{tpu_custom_call.1} parent=1 // pred_region
      %s26 = ssub.s32 3072, 3072
      %27 = vsyncadd [#allocation6], %s26
      %s28 = sshll.u32 [#allocation5], 4
      %s29 = int_to_ptr.vmem [resolvable:$true] %s28
      %34 = dma.hbm_to_vmem [thread:$0]  %s1, 3072, %s29, [#allocation6], 192, 192, 12
    $region9: #{tpu_custom_call.1} parent=1 // pred_fallthru
      _
    // Predicated region
    $region10: #{tpu_custom_call.1} parent=1 // pred_check
      _
    $region11: #{tpu_custom_call.1} parent=1 // pred_check_branch
      %36 = sbr.rel (0) target = $region13
    $region12: #{tpu_custom_call.1} parent=1 // pred_region
      _
    $region13: #{tpu_custom_call.1} parent=1 // pred_fallthru
      _
    // Predicated region
    $region14: #{tpu_custom_call.1} parent=1 // pred_check
      _
    $region15: #{tpu_custom_call.1} parent=1 // pred_check_branch
      %38 = sbr.rel (0) target = $region17
    $region16: #{tpu_custom_call.1} parent=1 // pred_region
      %39 = dma.done [#allocation3], 2048
    $region17: #{tpu_custom_call.1} parent=1 // pred_fallthru
      _
    // Predicated region
    $region18: #{tpu_custom_call.1} parent=1 // pred_check
      _
    $region19: #{tpu_custom_call.1} parent=1 // pred_check_branch
      %41 = sbr.rel (0) target = $region21
    $region20: #{tpu_custom_call.1} parent=1 // pred_region
      %42 = dma.done [#allocation6], 3072
    $region21: #{tpu_custom_call.1} parent=1 // pred_fallthru
      _
    %v44 = vld [vmem:[#allocation2] sm:$0xff]
    %v45 = vld [vmem:[#allocation2 + $0x8] sm:$0xff]
    %v46 = vld [vmem:[#allocation2 + $0x10] sm:$0xff]
    %v47 = vld [vmem:[#allocation2 + $0x18] sm:$0xff]
    %v48 = vld [vmem:[#allocation2 + $0x20] sm:$0xff]
    %v49 = vld [vmem:[#allocation2 + $0x28] sm:$0xff]
    %v50 = vld [vmem:[#allocation2 + $0x30] sm:$0xff]
    %v51 = vld [vmem:[#allocation2 + $0x38] sm:$0xff]
    %v52 = vld [vmem:[#allocation2 + $0x40] sm:$0xff]
    %v53 = vld [vmem:[#allocation2 + $0x48] sm:$0xff]
    %v54 = vld [vmem:[#allocation2 + $0x50] sm:$0xff]
    %v55 = vld [vmem:[#allocation2 + $0x58] sm:$0xff]
    %v56 = vld [vmem:[#allocation2 + $0x60] sm:$0xff]
    %v57 = vld [vmem:[#allocation2 + $0x68] sm:$0xff]
    %v58 = vld [vmem:[#allocation2 + $0x70] sm:$0xff]
    %v59 = vld [vmem:[#allocation2 + $0x78] sm:$0xff]
    %v60 = vpack.c.bf16 %v45, %v44
    %v61 = vpack.c.bf16 %v47, %v46
    %v62 = vpack.c.bf16 %v49, %v48
    %v63 = vpack.c.bf16 %v51, %v50
    %v64 = vpack.c.bf16 %v53, %v52
    %v65 = vpack.c.bf16 %v55, %v54
    %v66 = vpack.c.bf16 %v57, %v56
    %v67 = vpack.c.bf16 %v59, %v58
    %v68 = vld [vmem:[#allocation5] sm:$0xff]
    %v69 = vld [vmem:[#allocation5 + $0x8] sm:$0xf]
    %v70 = vld [vmem:[#allocation5 + $0xc] sm:$0xff]
    %v71 = vld [vmem:[#allocation5 + $0x14] sm:$0xf]
    %v72 = vld [vmem:[#allocation5 + $0x18] sm:$0xff]
    %v73 = vld [vmem:[#allocation5 + $0x20] sm:$0xf]
    %v74 = vld [vmem:[#allocation5 + $0x24] sm:$0xff]
    %v75 = vld [vmem:[#allocation5 + $0x2c] sm:$0xf]
    %v76 = vld [vmem:[#allocation5 + $0x30] sm:$0xff]
    %v77 = vld [vmem:[#allocation5 + $0x38] sm:$0xf]
    %v78 = vld [vmem:[#allocation5 + $0x3c] sm:$0xff]
    %v79 = vld [vmem:[#allocation5 + $0x44] sm:$0xf]
    %v80 = vld [vmem:[#allocation5 + $0x48] sm:$0xff]
    %v81 = vld [vmem:[#allocation5 + $0x50] sm:$0xf]
    %v82 = vld [vmem:[#allocation5 + $0x54] sm:$0xff]
    %v83 = vld [vmem:[#allocation5 + $0x5c] sm:$0xf]
    %v84 = vld [vmem:[#allocation5 + $0x60] sm:$0xff]
    %v85 = vld [vmem:[#allocation5 + $0x68] sm:$0xf]
    %v86 = vld [vmem:[#allocation5 + $0x6c] sm:$0xff]
    %v87 = vld [vmem:[#allocation5 + $0x74] sm:$0xf]
    %v88 = vld [vmem:[#allocation5 + $0x78] sm:$0xff]
    %v89 = vld [vmem:[#allocation5 + $0x80] sm:$0xf]
    %v90 = vld [vmem:[#allocation5 + $0x84] sm:$0xff]
    %v91 = vld [vmem:[#allocation5 + $0x8c] sm:$0xf]
    %v92 = vld [vmem:[#allocation5 + $0x90] sm:$0xff]
    %v93 = vld [vmem:[#allocation5 + $0x98] sm:$0xf]
    %v94 = vld [vmem:[#allocation5 + $0x9c] sm:$0xff]
    %v95 = vld [vmem:[#allocation5 + $0xa4] sm:$0xf]
    %v96 = vld [vmem:[#allocation5 + $0xa8] sm:$0xff]
    %v97 = vld [vmem:[#allocation5 + $0xb0] sm:$0xf]
    %v98 = vld [vmem:[#allocation5 + $0xb4] sm:$0xff]
    %v99 = vld [vmem:[#allocation5 + $0xbc] sm:$0xf]
    %v100 = vld [vmem:[%s2] sm:$0x7]
    %v102 = vlaneseq
    %v103 = vshrl.u32 %v102, 7
    %v104 = vsub.s32 0, %v103
    %v105 = vrot.slane %v100, %v104
    %v106 = vlaneseq
    %v107 = vshrl.u32 %v106, 7
    %v108 = vsub.s32 1, %v107
    %v109 = vrot.slane %v100, %v108
    %v110 = vlaneseq
    %v111 = vshrl.u32 %v110, 7
    %v112 = vsub.s32 2, %v111
    %v113 = vrot.slane %v100, %v112
    %v149 = vunpack.c.l.b16 %v68
    %v150 = vunpack.c.h.b16 %v68
    %v151 = vunpack.c.l.b16 %v69
    %v152 = vunpack.c.l.b16 %v70
    %v153 = vunpack.c.h.b16 %v70
    %v154 = vunpack.c.l.b16 %v71
    %v155 = vunpack.c.l.b16 %v72
    %v156 = vunpack.c.h.b16 %v72
    %v157 = vunpack.c.l.b16 %v73
    %v158 = vunpack.c.l.b16 %v74
    %v159 = vunpack.c.h.b16 %v74
    %v160 = vunpack.c.l.b16 %v75
    %v161 = vunpack.c.l.b16 %v76
    %v162 = vunpack.c.h.b16 %v76
    %v163 = vunpack.c.l.b16 %v77
    %v164 = vunpack.c.l.b16 %v78
    %v165 = vunpack.c.h.b16 %v78
    %v166 = vunpack.c.l.b16 %v79
    %v167 = vunpack.c.l.b16 %v80
    %v168 = vunpack.c.h.b16 %v80
    %v169 = vunpack.c.l.b16 %v81
    %v170 = vunpack.c.l.b16 %v82
    %v171 = vunpack.c.h.b16 %v82
    %v172 = vunpack.c.l.b16 %v83
    %v173 = vunpack.c.l.b16 %v84
    %v174 = vunpack.c.h.b16 %v84
    %v175 = vunpack.c.l.b16 %v85
    %v176 = vunpack.c.l.b16 %v86
    %v177 = vunpack.c.h.b16 %v86
    %v178 = vunpack.c.l.b16 %v87
    %v179 = vunpack.c.l.b16 %v88
    %v180 = vunpack.c.h.b16 %v88
    %v181 = vunpack.c.l.b16 %v89
    %v182 = vunpack.c.l.b16 %v90
    %v183 = vunpack.c.h.b16 %v90
    %v184 = vunpack.c.l.b16 %v91
    %v185 = vunpack.c.l.b16 %v92
    %v186 = vunpack.c.h.b16 %v92
    %v187 = vunpack.c.l.b16 %v93
    %v188 = vunpack.c.l.b16 %v94
    %v189 = vunpack.c.h.b16 %v94
    %v190 = vunpack.c.l.b16 %v95
    %v191 = vunpack.c.l.b16 %v96
    %v192 = vunpack.c.h.b16 %v96
    %v193 = vunpack.c.l.b16 %v97
    %v194 = vunpack.c.l.b16 %v98
    %v195 = vunpack.c.h.b16 %v98
    %v196 = vunpack.c.l.b16 %v99
    %v197 = vpack.c.b16 %v152, %v149
    %v198 = vpack.c.b16 %v153, %v150
    %v199 = vpack.c.b16 %v154, %v151
    %v200 = vpack.c.b16 %v158, %v155
    %v201 = vpack.c.b16 %v159, %v156
    %v202 = vpack.c.b16 %v160, %v157
    %v203 = vpack.c.b16 %v164, %v161
    %v204 = vpack.c.b16 %v165, %v162
    %v205 = vpack.c.b16 %v166, %v163
    %v206 = vpack.c.b16 %v170, %v167
    %v207 = vpack.c.b16 %v171, %v168
    %v208 = vpack.c.b16 %v172, %v169
    %v209 = vpack.c.b16 %v176, %v173
    %v210 = vpack.c.b16 %v177, %v174
    %v211 = vpack.c.b16 %v178, %v175
    %v212 = vpack.c.b16 %v182, %v179
    %v213 = vpack.c.b16 %v183, %v180
    %v214 = vpack.c.b16 %v184, %v181
    %v215 = vpack.c.b16 %v188, %v185
    %v216 = vpack.c.b16 %v189, %v186
    %v217 = vpack.c.b16 %v190, %v187
    %v218 = vpack.c.b16 %v194, %v191
    %v219 = vpack.c.b16 %v195, %v192
    %v220 = vpack.c.b16 %v196, %v193
    %245 = vmatprep.subr.bf16.mxu0 %v198
    %246 = vmatpush1.bf16.msra.mxu0 %v197
    %247 = vmatprep.subr.bf16.mxu0 %v201
    %248 = vmatpush1.bf16.msra.mxu0 %v200
    %249 = vmatprep.subr.bf16.mxu0 %v204
    %250 = vmatpush1.bf16.msra.mxu0 %v203
    %251 = vmatprep.subr.bf16.mxu0 %v207
    %252 = vmatpush1.bf16.msra.mxu0 %v206
    %253 = vmatprep.subr.bf16.mxu0 %v210
    %254 = vmatpush1.bf16.msra.mxu0 %v209
    %255 = vmatprep.subr.bf16.mxu0 %v213
    %256 = vmatpush1.bf16.msra.mxu0 %v212
    %257 = vmatprep.subr.bf16.mxu0 %v216
    %258 = vmatpush1.bf16.msra.mxu0 %v215
    %259 = vmatprep.subr.bf16.mxu0 %v219
    %260 = vmatpush1.bf16.msra.mxu0 %v218
    %261 = vmatprep.subr.bf16.mxu0 0
    %262 = vmatpush1.bf16.msra.mxu0 0
    %263 = vmatprep.subr.bf16.mxu0 0
    %264 = vmatpush1.bf16.msra.mxu0 0
    %265 = vmatprep.subr.bf16.mxu0 0
    %266 = vmatpush1.bf16.msra.mxu0 0
    %267 = vmatprep.subr.bf16.mxu0 0
    %268 = vmatpush1.bf16.msra.mxu0 0
    %269 = vmatprep.subr.bf16.mxu0 0
    %270 = vmatpush1.bf16.msra.mxu0 0
    %271 = vmatprep.subr.bf16.mxu0 0
    %272 = vmatpush1.bf16.msra.mxu0 0
    %273 = vmatprep.subr.bf16.mxu0 0
    %274 = vmatpush1.bf16.msra.mxu0 0
    %275 = vmatprep.subr.bf16.mxu0 0
    %276 = vmatpush1.bf16.msra.mxu0 0
    %277 = vmatprep.mubr.bf16.mxu0 0
    %278 = vmatmul.mubr.bf16.gmra.mrb[0].mxu0 %v60
    %v279 = vpop.f32.mrb[0].mxu0
    %v280 = vadd.f32 %v105, %v279
    %v281 = vpop.f32.mrb[0].mxu0
    %v282 = vadd.f32 %v109, %v281
    %v283 = vpop.f32.mrb[0].mxu0
    %v284 = vadd.f32 %v105, %v283
    %v285 = vpop.f32.mrb[0].mxu0
    %v286 = vadd.f32 %v109, %v285
    %287 = vmatprep.mubr.bf16.mxu0 0
    %288 = vmatmul.mubr.bf16.gmra.mrb[0].mxu0 %v61
    %v289 = vpop.f32.mrb[0].mxu0
    %v290 = vadd.f32 %v105, %v289
    %v291 = vpop.f32.mrb[0].mxu0
    %v292 = vadd.f32 %v109, %v291
    %v293 = vpop.f32.mrb[0].mxu0
    %v294 = vadd.f32 %v105, %v293
    %v295 = vpop.f32.mrb[0].mxu0
    %v296 = vadd.f32 %v109, %v295
    %297 = vmatprep.mubr.bf16.mxu0 0
    %298 = vmatmul.mubr.bf16.gmra.mrb[0].mxu0 %v62
    %v299 = vpop.f32.mrb[0].mxu0
    %v300 = vadd.f32 %v105, %v299
    %v301 = vpop.f32.mrb[0].mxu0
    %v302 = vadd.f32 %v109, %v301
    %v303 = vpop.f32.mrb[0].mxu0
    %v304 = vadd.f32 %v105, %v303
    %v305 = vpop.f32.mrb[0].mxu0
    %v306 = vadd.f32 %v109, %v305
    %307 = vmatprep.mubr.bf16.mxu0 0
    %308 = vmatmul.mubr.bf16.gmra.mrb[0].mxu0 %v63
    %v309 = vpop.f32.mrb[0].mxu0
    %v310 = vadd.f32 %v105, %v309
    %v311 = vpop.f32.mrb[0].mxu0
    %v312 = vadd.f32 %v109, %v311
    %v313 = vpop.f32.mrb[0].mxu0
    %v314 = vadd.f32 %v105, %v313
    %v315 = vpop.f32.mrb[0].mxu0
    %v316 = vadd.f32 %v109, %v315
    %317 = vmatprep.mubr.bf16.mxu0 0
    %318 = vmatmul.mubr.bf16.gmra.mrb[0].mxu0 %v64
    %v319 = vpop.f32.mrb[0].mxu0
    %v320 = vadd.f32 %v105, %v319
    %v321 = vpop.f32.mrb[0].mxu0
    %v322 = vadd.f32 %v109, %v321
    %v323 = vpop.f32.mrb[0].mxu0
    %v324 = vadd.f32 %v105, %v323
    %v325 = vpop.f32.mrb[0].mxu0
    %v326 = vadd.f32 %v109, %v325
    %327 = vmatprep.mubr.bf16.mxu0 0
    %328 = vmatmul.mubr.bf16.gmra.mrb[0].mxu0 %v65
    %v329 = vpop.f32.mrb[0].mxu0
    %v330 = vadd.f32 %v105, %v329
    %v331 = vpop.f32.mrb[0].mxu0
    %v332 = vadd.f32 %v109, %v331
    %v333 = vpop.f32.mrb[0].mxu0
    %v334 = vadd.f32 %v105, %v333
    %v335 = vpop.f32.mrb[0].mxu0
    %v336 = vadd.f32 %v109, %v335
    %337 = vmatprep.mubr.bf16.mxu0 0
    %338 = vmatmul.mubr.bf16.gmra.mrb[0].mxu0 %v66
    %v339 = vpop.f32.mrb[0].mxu0
    %v340 = vadd.f32 %v105, %v339
    %v341 = vpop.f32.mrb[0].mxu0
    %v342 = vadd.f32 %v109, %v341
    %v343 = vpop.f32.mrb[0].mxu0
    %v344 = vadd.f32 %v105, %v343
    %v345 = vpop.f32.mrb[0].mxu0
    %v346 = vadd.f32 %v109, %v345
    %347 = vmatprep.mubr.bf16.mxu0 0
    %348 = vmatmul.mubr.bf16.gmra.mrb[0].mxu0 %v67
    %v349 = vpop.f32.mrb[0].mxu0
    %v350 = vadd.f32 %v105, %v349
    %v351 = vpop.f32.mrb[0].mxu0
    %v352 = vadd.f32 %v109, %v351
    %v353 = vpop.f32.mrb[0].mxu0
    %v354 = vadd.f32 %v105, %v353
    %v355 = vpop.f32.mrb[0].mxu0
    %v356 = vadd.f32 %v109, %v355
    %357 = vdwg.mxu0
    %358 = vmatprep.subr.bf16.mxu0 0
    %359 = vmatpush1.bf16.msra.mxu0 %v199
    %360 = vmatprep.subr.bf16.mxu0 0
    %361 = vmatpush1.bf16.msra.mxu0 %v202
    %362 = vmatprep.subr.bf16.mxu0 0
    %363 = vmatpush1.bf16.msra.mxu0 %v205
    %364 = vmatprep.subr.bf16.mxu0 0
    %365 = vmatpush1.bf16.msra.mxu0 %v208
    %366 = vmatprep.subr.bf16.mxu0 0
    %367 = vmatpush1.bf16.msra.mxu0 %v211
    %368 = vmatprep.subr.bf16.mxu0 0
    %369 = vmatpush1.bf16.msra.mxu0 %v214
    %370 = vmatprep.subr.bf16.mxu0 0
    %371 = vmatpush1.bf16.msra.mxu0 %v217
    %372 = vmatprep.subr.bf16.mxu0 0
    %373 = vmatpush1.bf16.msra.mxu0 %v220
    %374 = vmatprep.subr.bf16.mxu0 0
    %375 = vmatpush1.bf16.msra.mxu0 0
    %376 = vmatprep.subr.bf16.mxu0 0
    %377 = vmatpush1.bf16.msra.mxu0 0
    %378 = vmatprep.subr.bf16.mxu0 0
    %379 = vmatpush1.bf16.msra.mxu0 0
    %380 = vmatprep.subr.bf16.mxu0 0
    %381 = vmatpush1.bf16.msra.mxu0 0
    %382 = vmatprep.subr.bf16.mxu0 0
    %383 = vmatpush1.bf16.msra.mxu0 0
    %384 = vmatprep.subr.bf16.mxu0 0
    %385 = vmatpush1.bf16.msra.mxu0 0
    %386 = vmatprep.subr.bf16.mxu0 0
    %387 = vmatpush1.bf16.msra.mxu0 0
    %388 = vmatprep.subr.bf16.mxu0 0
    %389 = vmatpush1.bf16.msra.mxu0 0
    %390 = vmatprep.mubr.bf16.mxu0 0
    %391 = vmatmul.mubr.bf16.gmra.mrb[0].mxu0 %v60
    %v392 = vpop.f32.mrb[0].mxu0
    %v393 = vadd.f32 %v113, %v392
    %v394 = vpop.f32.mrb[0].mxu0
    %v395 = vpop.f32.mrb[0].mxu0
    %v396 = vadd.f32 %v113, %v395
    %v397 = vpop.f32.mrb[0].mxu0
    %398 = vmatprep.mubr.bf16.mxu0 0
    %399 = vmatmul.mubr.bf16.gmra.mrb[0].mxu0 %v61
    %v400 = vpop.f32.mrb[0].mxu0
    %v401 = vadd.f32 %v113, %v400
    %v402 = vpop.f32.mrb[0].mxu0
    %v403 = vpop.f32.mrb[0].mxu0
    %v404 = vadd.f32 %v113, %v403
    %v405 = vpop.f32.mrb[0].mxu0
    %406 = vmatprep.mubr.bf16.mxu0 0
    %407 = vmatmul.mubr.bf16.gmra.mrb[0].mxu0 %v62
    %v408 = vpop.f32.mrb[0].mxu0
    %v409 = vadd.f32 %v113, %v408
    %v410 = vpop.f32.mrb[0].mxu0
    %v411 = vpop.f32.mrb[0].mxu0
    %v412 = vadd.f32 %v113, %v411
    %v413 = vpop.f32.mrb[0].mxu0
    %414 = vmatprep.mubr.bf16.mxu0 0
    %415 = vmatmul.mubr.bf16.gmra.mrb[0].mxu0 %v63
    %v416 = vpop.f32.mrb[0].mxu0
    %v417 = vadd.f32 %v113, %v416
    %v418 = vpop.f32.mrb[0].mxu0
    %v419 = vpop.f32.mrb[0].mxu0
    %v420 = vadd.f32 %v113, %v419
    %v421 = vpop.f32.mrb[0].mxu0
    %422 = vmatprep.mubr.bf16.mxu0 0
    %423 = vmatmul.mubr.bf16.gmra.mrb[0].mxu0 %v64
    %v424 = vpop.f32.mrb[0].mxu0
    %v425 = vadd.f32 %v113, %v424
    %v426 = vpop.f32.mrb[0].mxu0
    %v427 = vpop.f32.mrb[0].mxu0
    %v428 = vadd.f32 %v113, %v427
    %v429 = vpop.f32.mrb[0].mxu0
    %430 = vmatprep.mubr.bf16.mxu0 0
    %431 = vmatmul.mubr.bf16.gmra.mrb[0].mxu0 %v65
    %v432 = vpop.f32.mrb[0].mxu0
    %v433 = vadd.f32 %v113, %v432
    %v434 = vpop.f32.mrb[0].mxu0
    %v435 = vpop.f32.mrb[0].mxu0
    %v436 = vadd.f32 %v113, %v435
    %v437 = vpop.f32.mrb[0].mxu0
    %438 = vmatprep.mubr.bf16.mxu0 0
    %439 = vmatmul.mubr.bf16.gmra.mrb[0].mxu0 %v66
    %v440 = vpop.f32.mrb[0].mxu0
    %v441 = vadd.f32 %v113, %v440
    %v442 = vpop.f32.mrb[0].mxu0
    %v443 = vpop.f32.mrb[0].mxu0
    %v444 = vadd.f32 %v113, %v443
    %v445 = vpop.f32.mrb[0].mxu0
    %446 = vmatprep.mubr.bf16.mxu0 0
    %447 = vmatmul.mubr.bf16.gmra.mrb[0].mxu0 %v67
    %v448 = vpop.f32.mrb[0].mxu0
    %v449 = vadd.f32 %v113, %v448
    %v450 = vpop.f32.mrb[0].mxu0
    %v451 = vpop.f32.mrb[0].mxu0
    %v452 = vadd.f32 %v113, %v451
    %v453 = vpop.f32.mrb[0].mxu0
    %454 = vdwg.mxu0
    %v455 = vpack.c.bf16 %v284, %v280
    %v456 = vpack.c.bf16 %v286, %v282
    %v457 = vpack.c.bf16 %v396, %v393
    %v458 = vpack.c.bf16 %v294, %v290
    %v459 = vpack.c.bf16 %v296, %v292
    %v460 = vpack.c.bf16 %v404, %v401
    %v461 = vpack.c.bf16 %v304, %v300
    %v462 = vpack.c.bf16 %v306, %v302
    %v463 = vpack.c.bf16 %v412, %v409
    %v464 = vpack.c.bf16 %v314, %v310
    %v465 = vpack.c.bf16 %v316, %v312
    %v466 = vpack.c.bf16 %v420, %v417
    %v467 = vpack.c.bf16 %v324, %v320
    %v468 = vpack.c.bf16 %v326, %v322
    %v469 = vpack.c.bf16 %v428, %v425
    %v470 = vpack.c.bf16 %v334, %v330
    %v471 = vpack.c.bf16 %v336, %v332
    %v472 = vpack.c.bf16 %v436, %v433
    %v473 = vpack.c.bf16 %v344, %v340
    %v474 = vpack.c.bf16 %v346, %v342
    %v475 = vpack.c.bf16 %v444, %v441
    %v476 = vpack.c.bf16 %v354, %v350
    %v477 = vpack.c.bf16 %v356, %v352
    %v478 = vpack.c.bf16 %v452, %v449
    %v503 = vunpack.c.l.b16 %v455
    %v504 = vunpack.c.l.b16 %v456
    %v505 = vunpack.c.l.b16 %v457
    %v506 = vunpack.c.h.b16 %v455
    %v507 = vunpack.c.h.b16 %v456
    %v508 = vunpack.c.h.b16 %v457
    %v509 = vunpack.c.l.b16 %v458
    %v510 = vunpack.c.l.b16 %v459
    %v511 = vunpack.c.l.b16 %v460
    %v512 = vunpack.c.h.b16 %v458
    %v513 = vunpack.c.h.b16 %v459
    %v514 = vunpack.c.h.b16 %v460
    %v515 = vunpack.c.l.b16 %v461
    %v516 = vunpack.c.l.b16 %v462
    %v517 = vunpack.c.l.b16 %v463
    %v518 = vunpack.c.h.b16 %v461
    %v519 = vunpack.c.h.b16 %v462
    %v520 = vunpack.c.h.b16 %v463
    %v521 = vunpack.c.l.b16 %v464
    %v522 = vunpack.c.l.b16 %v465
    %v523 = vunpack.c.l.b16 %v466
    %v524 = vunpack.c.h.b16 %v464
    %v525 = vunpack.c.h.b16 %v465
    %v526 = vunpack.c.h.b16 %v466
    %v527 = vunpack.c.l.b16 %v467
    %v528 = vunpack.c.l.b16 %v468
    %v529 = vunpack.c.l.b16 %v469
    %v530 = vunpack.c.h.b16 %v467
    %v531 = vunpack.c.h.b16 %v468
    %v532 = vunpack.c.h.b16 %v469
    %v533 = vunpack.c.l.b16 %v470
    %v534 = vunpack.c.l.b16 %v471
    %v535 = vunpack.c.l.b16 %v472
    %v536 = vunpack.c.h.b16 %v470
    %v537 = vunpack.c.h.b16 %v471
    %v538 = vunpack.c.h.b16 %v472
    %v539 = vunpack.c.l.b16 %v473
    %v540 = vunpack.c.l.b16 %v474
    %v541 = vunpack.c.l.b16 %v475
    %v542 = vunpack.c.h.b16 %v473
    %v543 = vunpack.c.h.b16 %v474
    %v544 = vunpack.c.h.b16 %v475
    %v545 = vunpack.c.l.b16 %v476
    %v546 = vunpack.c.l.b16 %v477
    %v547 = vunpack.c.l.b16 %v478
    %v548 = vunpack.c.h.b16 %v476
    %v549 = vunpack.c.h.b16 %v477
    %v550 = vunpack.c.h.b16 %v478
    %v551 = vpack.c.b16 %v504, %v503
    %v552 = vpack.c.b16 %v505, %v505
    %v553 = vpack.c.b16 %v507, %v506
    %v554 = vpack.c.b16 %v508, %v508
    %v555 = vpack.c.b16 %v510, %v509
    %v556 = vpack.c.b16 %v511, %v511
    %v557 = vpack.c.b16 %v513, %v512
    %v558 = vpack.c.b16 %v514, %v514
    %v559 = vpack.c.b16 %v516, %v515
    %v560 = vpack.c.b16 %v517, %v517
    %v561 = vpack.c.b16 %v519, %v518
    %v562 = vpack.c.b16 %v520, %v520
    %v563 = vpack.c.b16 %v522, %v521
    %v564 = vpack.c.b16 %v523, %v523
    %v565 = vpack.c.b16 %v525, %v524
    %v566 = vpack.c.b16 %v526, %v526
    %v567 = vpack.c.b16 %v528, %v527
    %v568 = vpack.c.b16 %v529, %v529
    %v569 = vpack.c.b16 %v531, %v530
    %v570 = vpack.c.b16 %v532, %v532
    %v571 = vpack.c.b16 %v534, %v533
    %v572 = vpack.c.b16 %v535, %v535
    %v573 = vpack.c.b16 %v537, %v536
    %v574 = vpack.c.b16 %v538, %v538
    %v575 = vpack.c.b16 %v540, %v539
    %v576 = vpack.c.b16 %v541, %v541
    %v577 = vpack.c.b16 %v543, %v542
    %v578 = vpack.c.b16 %v544, %v544
    %v579 = vpack.c.b16 %v546, %v545
    %v580 = vpack.c.b16 %v547, %v547
    %v581 = vpack.c.b16 %v549, %v548
    %v582 = vpack.c.b16 %v550, %v550
    %615 = vst [vmem:[#allocation7] sm:$0xff] %v551
    %616 = vst [vmem:[#allocation7 + $0x8] sm:$0xf] %v552
    %617 = vst [vmem:[#allocation7 + $0xc] sm:$0xff] %v553
    %618 = vst [vmem:[#allocation7 + $0x14] sm:$0xf] %v554
    %619 = vst [vmem:[#allocation7 + $0x18] sm:$0xff] %v555
    %620 = vst [vmem:[#allocation7 + $0x20] sm:$0xf] %v556
    %621 = vst [vmem:[#allocation7 + $0x24] sm:$0xff] %v557
    %622 = vst [vmem:[#allocation7 + $0x2c] sm:$0xf] %v558
    %623 = vst [vmem:[#allocation7 + $0x30] sm:$0xff] %v559
    %624 = vst [vmem:[#allocation7 + $0x38] sm:$0xf] %v560
    %625 = vst [vmem:[#allocation7 + $0x3c] sm:$0xff] %v561
    %626 = vst [vmem:[#allocation7 + $0x44] sm:$0xf] %v562
    %627 = vst [vmem:[#allocation7 + $0x48] sm:$0xff] %v563
    %628 = vst [vmem:[#allocation7 + $0x50] sm:$0xf] %v564
    %629 = vst [vmem:[#allocation7 + $0x54] sm:$0xff] %v565
    %630 = vst [vmem:[#allocation7 + $0x5c] sm:$0xf] %v566
    %631 = vst [vmem:[#allocation7 + $0x60] sm:$0xff] %v567
    %632 = vst [vmem:[#allocation7 + $0x68] sm:$0xf] %v568
    %633 = vst [vmem:[#allocation7 + $0x6c] sm:$0xff] %v569
    %634 = vst [vmem:[#allocation7 + $0x74] sm:$0xf] %v570
    %635 = vst [vmem:[#allocation7 + $0x78] sm:$0xff] %v571
    %636 = vst [vmem:[#allocation7 + $0x80] sm:$0xf] %v572
    %637 = vst [vmem:[#allocation7 + $0x84] sm:$0xff] %v573
    %638 = vst [vmem:[#allocation7 + $0x8c] sm:$0xf] %v574
    %639 = vst [vmem:[#allocation7 + $0x90] sm:$0xff] %v575
    %640 = vst [vmem:[#allocation7 + $0x98] sm:$0xf] %v576
    %641 = vst [vmem:[#allocation7 + $0x9c] sm:$0xff] %v577
    %642 = vst [vmem:[#allocation7 + $0xa4] sm:$0xf] %v578
    %643 = vst [vmem:[#allocation7 + $0xa8] sm:$0xff] %v579
    %644 = vst [vmem:[#allocation7 + $0xb0] sm:$0xf] %v580
    %645 = vst [vmem:[#allocation7 + $0xb4] sm:$0xff] %v581
    %646 = vst [vmem:[#allocation7 + $0xbc] sm:$0xf] %v582
    // Predicated region
    $region22: #{tpu_custom_call.1} parent=1 // pred_check
      _
    $region23: #{tpu_custom_call.1} parent=1 // pred_check_branch
      %648 = sbr.rel (0) target = $region25
    $region24: #{tpu_custom_call.1} parent=1 // pred_region
      %s650 = ssub.s32 3072, 3072
      %651 = vsyncadd [#allocation4], %s650
      %s652 = sshll.u32 [#allocation7], 4
      %s653 = int_to_ptr.vmem [resolvable:$true] %s652
      %658 = dma.vmem_to_hbm [thread:$0]  %s653, 3072, %s3, [#allocation4], 192, 192, 12
    $region25: #{tpu_custom_call.1} parent=1 // pred_fallthru
      _
    // Predicated region
    $region26: #{tpu_custom_call.1} parent=1 // pred_check
      _
    $region27: #{tpu_custom_call.1} parent=1 // pred_check_branch
      %660 = sbr.rel (0) target = $region29
    $region28: #{tpu_custom_call.1} parent=1 // pred_region
      %661 = dma.done [#allocation4], 3072
    $region29: #{tpu_custom_call.1} parent=1 // pred_fallthru
      _
    %662 = vsyncpa [#allocation3], 1
    %663 = vsyncpa [#allocation6], 1
    %664 = vsyncpa [#allocation4], 1

</llo_original>
